<compile_context>
chip_gen: v5e
topology: v5e:2x2
jax: 0.10.0
libtpu: 0.0.40
codegen_flags: <defaults>
</compile_context>

<pallas_src>
import functools

import jax
import jax.numpy as jnp
from jax.experimental import pallas as pl
from jax.experimental.pallas import tpu as pltpu


def _resblock_kernel(x_ref, w_ref, b_ref, out_ref, *, N, H, W, Cin, Cout, K, pad):
    """Whole batch in one grid step.

    x_ref  : (N, Cin, H, W)      raw NCHW input (f32) — relayout done in-kernel
    w_ref  : (Cin*K*W, W*Cout)   bf16 banded conv weight (+ shortcut folded in)
    b_ref  : (1, W*Cout)         f32 shortcut bias tiled across W
    out_ref: (N, H, W*Cout)      lane-dense output rows (W*Cout == 128 here)
    """
    x = x_ref[...]                                     # (N, Cin, H, W) f32

    # Build the im2row LHS with contraction index order (ci, dy, wi).
    # The "same" H-padding is realised with zero rows; the W-padding and the
    # W-offset (dx) structure are baked into the banded weight.
    parts = []
    for ci in range(Cin):                              # static loop, Cin small
        xc = x[:, ci, :, :]                            # (N, H, W)
        for dy in range(K):
            off = dy - pad                             # input-row offset for output row h
            if off < 0:
                piece = jnp.concatenate(
                    [jnp.zeros((N, -off, W), x.dtype), xc[:, :H + off, :]], axis=1)
            elif off > 0:
                piece = jnp.concatenate(
                    [xc[:, off:, :], jnp.zeros((N, off, W), x.dtype)], axis=1)
            else:
                piece = xc
            parts.append(piece)                        # (N, H, W)

    lhs = jnp.concatenate(parts, axis=-1)              # (N, H, Cin*K*W)
    lhs = lhs.reshape(N * H, Cin * K * W).astype(w_ref.dtype)   # bf16 for the MXU

    # Single MXU contraction: batch*height stacked into M, f32 accumulation.
    acc = jnp.dot(lhs, w_ref[...], preferred_element_type=jnp.float32)  # (N*H, W*Cout)

    y = acc + b_ref[...]                               # shortcut bias (f32)
    y = y * jax.nn.sigmoid(y)                          # SiLU, f32 epilogue
    out_ref[...] = y.reshape(N, H, W * Cout).astype(out_ref.dtype)


def prepare_resblock_params(w_conv_oihw, w_short, b_short, W, *,
                            padding=1, compute_dtype=jnp.bfloat16):
    """One-time weight prep (call at parameter-load time, NOT per forward).

    w_conv_oihw : (Cout, Cin, K, K)  PyTorch Conv2d weight (bias=False)
    w_short     : (Cout, Cin)        Shortcut2d Linear weight
    b_short     : (Cout,)            Shortcut2d Linear bias
    Returns (wband, brow):
      wband : (Cin*K*W, W*Cout) compute_dtype — banded conv weight with the
              W-offset (dx) structure, implicit W zero-padding and the 1x1
              shortcut folded into the center tap.
      brow  : (1, W*Cout) f32     — shortcut bias tiled across W.
    """
    Cout, Cin, K, K2 = w_conv_oihw.shape
    assert K == K2, "square kernels only"
    pad = padding
    assert pad == (K - 1) // 2, "only 'same' padding (padding == (K-1)//2) supported"

    # Guard the banded-weight blow-up (quadratic in W); v7x's 32 MiB default
    # scoped VMEM is hit first.  For larger W/C, tile along W instead.
    band_bytes = Cin * K * W * W * Cout * jnp.dtype(compute_dtype).itemsize
    assert band_bytes <= 8 * 1024 * 1024, (
        f"banded weight is {band_bytes/2**20:.1f} MiB; tile along W or switch to "
        "an im2col formulation for this problem size")

    wf = jnp.transpose(w_conv_oihw, (2, 3, 1, 0)).astype(jnp.float32)  # (K,K,Cin,Cout) [dy,dx,ci,co]
    # Fold Shortcut2d (a 1x1 conv at the center tap) into the conv weight.
    wf = wf.at[pad, pad].add(jnp.transpose(w_short, (1, 0)).astype(jnp.float32))

    # wband[(ci,dy,wi), (wo,co)] = wf[dy, wi-wo+pad, ci, co]  (0 if dx out of range)
    wi = jnp.arange(W)
    wo = jnp.arange(W)
    wfull = jnp.zeros((Cin, K, W, W, Cout), jnp.float32)
    for dx in range(K):
        sel = (wi[:, None] == (wo[None, :] + (dx - pad))).astype(jnp.float32)  # (Wi, Wo)
        wdx = jnp.transpose(wf[:, dx], (1, 0, 2))          # (Cin, K[dy], Cout)
        wfull = wfull + sel[None, None, :, :, None] * wdx[:, :, None, None, :]
    wband = wfull.reshape(Cin * K * W, W * Cout).astype(compute_dtype)

    brow = jnp.tile(b_short.astype(jnp.float32), W).reshape(1, W * Cout)
    return wband, brow


def conv2d_resblock_rows(x_nchw, wband, brow):
    """Fused forward; returns lane-dense NHWC rows (N, H, W*Cout). No host-side
    relayout of the activations — the raw NCHW block goes straight to VMEM."""
    N, Cin, H, W = x_nchw.shape
    WCout = wband.shape[1]
    Cout = WCout // W
    K = wband.shape[0] // (Cin * W)
    pad = (K - 1) // 2

    kernel = functools.partial(_resblock_kernel,
                               N=N, H=H, W=W, Cin=Cin, Cout=Cout, K=K, pad=pad)

    return pl.pallas_call(
        kernel,
        out_shape=jax.ShapeDtypeStruct((N, H, W * Cout), x_nchw.dtype),
        grid_spec=pltpu.PrefetchScalarGridSpec(
            num_scalar_prefetch=0,
            grid=(1,),   # whole (tiny) batch in one step: M = N*H on the MXU
            in_specs=[
                pl.BlockSpec((N, Cin, H, W), lambda i: (0, 0, 0, 0)),
                pl.BlockSpec(wband.shape, lambda i: (0, 0)),
                pl.BlockSpec(brow.shape, lambda i: (0, 0)),
            ],
            out_specs=pl.BlockSpec((N, H, W * Cout), lambda i: (0, 0, 0)),
        ),
        compiler_params=pltpu.CompilerParams(
            dimension_semantics=("arbitrary",)),
    )(x_nchw, wband, brow)


def conv2d_resblock(x_nchw, wband, brow):
    """Module-compatible forward: (N, Cin, H, W) -> (N, Cout, H, W).
    The only wrapper op is the final NHWC->NCHW transpose; consumers that can
    take NHWC should use conv2d_resblock_rows() directly and skip it."""
    N, Cin, H, W = x_nchw.shape
    rows = conv2d_resblock_rows(x_nchw, wband, brow)       # (N, H, W*Cout)
    Cout = rows.shape[-1] // W
    return jnp.transpose(rows.reshape(N, H, W, Cout), (0, 3, 1, 2))


def _reference(x_nchw, w_conv_oihw, w_short, b_short, padding=1):
    """Pure-JAX f32 reference mirroring the PyTorch forward (eval mode)."""
    conv = jax.lax.conv_general_dilated(
        x_nchw, w_conv_oihw, window_strides=(1, 1),
        padding=((padding, padding), (padding, padding)),
        dimension_numbers=("NCHW", "OIHW", "NCHW"))
    # Shortcut2d: permute -> Linear -> permute
    x_nhwc = jnp.transpose(x_nchw, (0, 2, 3, 1))
    h = x_nhwc @ w_short.T + b_short
    h = jnp.transpose(h, (0, 3, 1, 2))
    y = conv + h
    return y * jax.nn.sigmoid(y)


if __name__ == "__main__":
    key = jax.random.PRNGKey(0)
    k_x, k_w, k_ws, k_bs = jax.random.split(key, 4)

    N, Cin, Cout, H, W = 2, 4, 8, 16, 16
    x = jax.random.normal(k_x, (N, Cin, H, W), dtype=jnp.float32)

    # Deterministic synthetic parameters (shapes match the nn.Module's params):
    #   conv.0.weight : (out_dim, in_dim, 3, 3), bias=False
    #   res.shortcut.weight : (out_dim, in_dim), res.shortcut.bias : (out_dim,)
    w_conv = 0.1 * jax.random.normal(k_w, (Cout, Cin, 3, 3), dtype=jnp.float32)
    w_short = 0.1 * jax.random.normal(k_ws, (Cout, Cin), dtype=jnp.float32)
    b_short = 0.1 * jax.random.normal(k_bs, (Cout,), dtype=jnp.float32)

    # One-time parameter prep (hoisted out of the forward path).
    wband, brow = prepare_resblock_params(w_conv, w_short, b_short, W)

    fwd = jax.jit(conv2d_resblock)
    out = jax.block_until_ready(fwd(x, wband, brow))

    ref = _reference(x, w_conv, w_short, b_short)
    assert out.shape == (N, Cout, H, W)
    # bf16 weights/activations in the matmul => relaxed tolerance vs. f32 ref.
    assert jnp.allclose(out, ref, atol=3e-2, rtol=3e-2), (
        f"mismatch vs reference: max abs err {jnp.max(jnp.abs(out - ref))}")

    print("KERNEL_OK")
</pallas_src>

<mosaic_0001>
module attributes {stable_mosaic.version = 11 : i64} {
  func.func @_resblock_kernel(%arg0: i32, %arg1: memref<2x4x16x16xf32, #tpu.memory_space<vmem>>, %arg2: memref<192x128xbf16, #tpu.memory_space<vmem>>, %arg3: memref<1x128xf32, #tpu.memory_space<vmem>>, %arg4: memref<2x16x128xf32, #tpu.memory_space<vmem>>) attributes {dimension_semantics = [#tpu.dimension_semantics<arbitrary>], iteration_bounds = array<i64: 1>, scalar_prefetch = 0 : i64, scratch_operands = 0 : i64, tpu.core_type = #tpu.core_type<tc>, window_params = [{pipeline_mode = #tpu.pipeline_mode<synchronous>, transform_indices = @transform_0, window_bounds = array<i64: 2, 4, 16, 16>}, {pipeline_mode = #tpu.pipeline_mode<synchronous>, transform_indices = @transform_1, window_bounds = array<i64: 192, 128>}, {pipeline_mode = #tpu.pipeline_mode<synchronous>, transform_indices = @transform_2, window_bounds = array<i64: 1, 128>}, {pipeline_mode = #tpu.pipeline_mode<synchronous>, transform_indices = @transform_3, window_bounds = array<i64: 2, 16, 128>}]} {
    %c0 = arith.constant 0 : index
    %c0_0 = arith.constant 0 : index
    %c0_1 = arith.constant 0 : index
    %c0_2 = arith.constant 0 : index
    %0 = vector.load %arg1[%c0, %c0_0, %c0_1, %c0_2] : memref<2x4x16x16xf32, #tpu.memory_space<vmem>>, vector<2x4x16x16xf32>
    %1 = vector.extract_strided_slice %0 {offsets = [0, 0, 0, 0], sizes = [2, 1, 16, 16], strides = [1, 1, 1, 1]} : vector<2x4x16x16xf32> to vector<2x1x16x16xf32>
    %2 = vector.shape_cast %1 : vector<2x1x16x16xf32> to vector<2x16x16xf32>
    %cst = arith.constant 0.000000e+00 : f32
    %3 = vector.broadcast %cst : f32 to vector<2x1x16xf32>
    %4 = vector.extract_strided_slice %2 {offsets = [0, 0, 0], sizes = [2, 15, 16], strides = [1, 1, 1]} : vector<2x16x16xf32> to vector<2x15x16xf32>
    %5 = tpu.concatenate %3, %4 in 1 : vector<2x1x16xf32>, vector<2x15x16xf32> -> vector<2x16x16xf32>
    %6 = vector.extract_strided_slice %2 {offsets = [0, 1, 0], sizes = [2, 15, 16], strides = [1, 1, 1]} : vector<2x16x16xf32> to vector<2x15x16xf32>
    %cst_3 = arith.constant 0.000000e+00 : f32
    %7 = vector.broadcast %cst_3 : f32 to vector<2x1x16xf32>
    %8 = tpu.concatenate %6, %7 in 1 : vector<2x15x16xf32>, vector<2x1x16xf32> -> vector<2x16x16xf32>
    %9 = vector.extract_strided_slice %0 {offsets = [0, 1, 0, 0], sizes = [2, 1, 16, 16], strides = [1, 1, 1, 1]} : vector<2x4x16x16xf32> to vector<2x1x16x16xf32>
    %10 = vector.shape_cast %9 : vector<2x1x16x16xf32> to vector<2x16x16xf32>
    %cst_4 = arith.constant 0.000000e+00 : f32
    %11 = vector.broadcast %cst_4 : f32 to vector<2x1x16xf32>
    %12 = vector.extract_strided_slice %10 {offsets = [0, 0, 0], sizes = [2, 15, 16], strides = [1, 1, 1]} : vector<2x16x16xf32> to vector<2x15x16xf32>
    %13 = tpu.concatenate %11, %12 in 1 : vector<2x1x16xf32>, vector<2x15x16xf32> -> vector<2x16x16xf32>
    %14 = vector.extract_strided_slice %10 {offsets = [0, 1, 0], sizes = [2, 15, 16], strides = [1, 1, 1]} : vector<2x16x16xf32> to vector<2x15x16xf32>
    %cst_5 = arith.constant 0.000000e+00 : f32
    %15 = vector.broadcast %cst_5 : f32 to vector<2x1x16xf32>
    %16 = tpu.concatenate %14, %15 in 1 : vector<2x15x16xf32>, vector<2x1x16xf32> -> vector<2x16x16xf32>
    %17 = vector.extract_strided_slice %0 {offsets = [0, 2, 0, 0], sizes = [2, 1, 16, 16], strides = [1, 1, 1, 1]} : vector<2x4x16x16xf32> to vector<2x1x16x16xf32>
    %18 = vector.shape_cast %17 : vector<2x1x16x16xf32> to vector<2x16x16xf32>
    %cst_6 = arith.constant 0.000000e+00 : f32
    %19 = vector.broadcast %cst_6 : f32 to vector<2x1x16xf32>
    %20 = vector.extract_strided_slice %18 {offsets = [0, 0, 0], sizes = [2, 15, 16], strides = [1, 1, 1]} : vector<2x16x16xf32> to vector<2x15x16xf32>
    %21 = tpu.concatenate %19, %20 in 1 : vector<2x1x16xf32>, vector<2x15x16xf32> -> vector<2x16x16xf32>
    %22 = vector.extract_strided_slice %18 {offsets = [0, 1, 0], sizes = [2, 15, 16], strides = [1, 1, 1]} : vector<2x16x16xf32> to vector<2x15x16xf32>
    %cst_7 = arith.constant 0.000000e+00 : f32
    %23 = vector.broadcast %cst_7 : f32 to vector<2x1x16xf32>
    %24 = tpu.concatenate %22, %23 in 1 : vector<2x15x16xf32>, vector<2x1x16xf32> -> vector<2x16x16xf32>
    %25 = vector.extract_strided_slice %0 {offsets = [0, 3, 0, 0], sizes = [2, 1, 16, 16], strides = [1, 1, 1, 1]} : vector<2x4x16x16xf32> to vector<2x1x16x16xf32>
    %26 = vector.shape_cast %25 : vector<2x1x16x16xf32> to vector<2x16x16xf32>
    %cst_8 = arith.constant 0.000000e+00 : f32
    %27 = vector.broadcast %cst_8 : f32 to vector<2x1x16xf32>
    %28 = vector.extract_strided_slice %26 {offsets = [0, 0, 0], sizes = [2, 15, 16], strides = [1, 1, 1]} : vector<2x16x16xf32> to vector<2x15x16xf32>
    %29 = tpu.concatenate %27, %28 in 1 : vector<2x1x16xf32>, vector<2x15x16xf32> -> vector<2x16x16xf32>
    %30 = vector.extract_strided_slice %26 {offsets = [0, 1, 0], sizes = [2, 15, 16], strides = [1, 1, 1]} : vector<2x16x16xf32> to vector<2x15x16xf32>
    %cst_9 = arith.constant 0.000000e+00 : f32
    %31 = vector.broadcast %cst_9 : f32 to vector<2x1x16xf32>
    %32 = tpu.concatenate %30, %31 in 1 : vector<2x15x16xf32>, vector<2x1x16xf32> -> vector<2x16x16xf32>
    %33 = tpu.concatenate %5, %2, %8, %13, %10, %16, %21, %18, %24, %29, %26, %32 in 2 : vector<2x16x16xf32>, vector<2x16x16xf32>, vector<2x16x16xf32>, vector<2x16x16xf32>, vector<2x16x16xf32>, vector<2x16x16xf32>, vector<2x16x16xf32>, vector<2x16x16xf32>, vector<2x16x16xf32>, vector<2x16x16xf32>, vector<2x16x16xf32>, vector<2x16x16xf32> -> vector<2x16x192xf32>
    %34 = vector.shape_cast %33 : vector<2x16x192xf32> to vector<32x192xf32>
    %35 = arith.truncf %34 : vector<32x192xf32> to vector<32x192xbf16>
    %c0_10 = arith.constant 0 : index
    %c0_11 = arith.constant 0 : index
    %36 = vector.load %arg2[%c0_10, %c0_11] : memref<192x128xbf16, #tpu.memory_space<vmem>>, vector<192x128xbf16>
    %cst_12 = arith.constant dense<0.000000e+00> : vector<32x128xf32>
    %37 = tpu.matmul %35, %36, %cst_12 {dimension_numbers = #tpu.dot_dimension_numbers<[1], [0], [0], [1], [0, 0, 1, 1], [], []>} : vector<32x192xbf16>, vector<192x128xbf16>, vector<32x128xf32> -> vector<32x128xf32>
    %c0_13 = arith.constant 0 : index
    %c0_14 = arith.constant 0 : index
    %38 = vector.load %arg3[%c0_13, %c0_14] : memref<1x128xf32, #tpu.memory_space<vmem>>, vector<1x128xf32>
    %39 = vector.broadcast %38 : vector<1x128xf32> to vector<32x128xf32>
    %40 = arith.addf %37, %39 : vector<32x128xf32>
    %41 = arith.negf %40 : vector<32x128xf32>
    %42 = math.exp %41 : vector<32x128xf32>
    %cst_15 = arith.constant 1.000000e+00 : f32
    %43 = vector.broadcast %cst_15 : f32 to vector<32x128xf32>
    %44 = arith.addf %43, %42 : vector<32x128xf32>
    %45 = arith.divf %43, %44 : vector<32x128xf32>
    %46 = arith.mulf %40, %45 : vector<32x128xf32>
    %47 = vector.shape_cast %46 : vector<32x128xf32> to vector<2x16x128xf32>
    %c0_16 = arith.constant 0 : index
    %c0_17 = arith.constant 0 : index
    %c0_18 = arith.constant 0 : index
    %48 = vector.load %arg4[%c0_16, %c0_17, %c0_18] : memref<2x16x128xf32, #tpu.memory_space<vmem>>, vector<2x16x128xf32>
    tpu.vector_store %arg4[%c0_16, %c0_17, %c0_18], %47 {strides = array<i32>} : memref<2x16x128xf32, #tpu.memory_space<vmem>>, vector<2x16x128xf32>,
    return
  }
  func.func @transform_0(%arg0: i32) -> (i32, i32, i32, i32) {
    %c0_i32 = arith.constant 0 : i32
    %c0_i32_0 = arith.constant 0 : i32
    %c0_i32_1 = arith.constant 0 : i32
    %c0_i32_2 = arith.constant 0 : i32
    %c0_i32_3 = arith.constant 0 : i32
    return %c0_i32, %c0_i32_0, %c0_i32_1, %c0_i32_2 : i32, i32, i32, i32
  }
  func.func @transform_1(%arg0: i32) -> (i32, i32) {
    %c0_i32 = arith.constant 0 : i32
    %c0_i32_0 = arith.constant 0 : i32
    %c0_i32_1 = arith.constant 0 : i32
    return %c0_i32, %c0_i32_0 : i32, i32
  }
  func.func @transform_2(%arg0: i32) -> (i32, i32) {
    %c0_i32 = arith.constant 0 : i32
    %c0_i32_0 = arith.constant 0 : i32
    %c0_i32_1 = arith.constant 0 : i32
    return %c0_i32, %c0_i32_0 : i32, i32
  }
  func.func @transform_3(%arg0: i32) -> (i32, i32, i32) {
    %c0_i32 = arith.constant 0 : i32
    %c0_i32_0 = arith.constant 0 : i32
    %c0_i32_1 = arith.constant 0 : i32
    %c0_i32_2 = arith.constant 0 : i32
    return %c0_i32, %c0_i32_0, %c0_i32_1 : i32, i32, i32
  }
}

</mosaic_0001>

<llo_original>
// kernel: conv2d_resblock.1
$region0: #{conv2d_resblock.1}
  #allocation0 [shape = 'u32[]', space=smem, size = 0x4, offset = 0x4, fixed_abs, tag = 'smem constant byte address 0x4 - core index']
  #allocation1 [shape = 'u32[72,128]{1,0:T(1,128)}', space=vmem, size = 0x9000, scoped, tag = 'internal scratch']
  %s0 = inlined_call_operand.hbm [shape: f32[2,4,16,16], index: 0, kind: input, shape index: {}]
  %s1 = inlined_call_operand.hbm [shape: bf16[192,128], index: 1, kind: input, shape index: {}]
  %s2 = inlined_call_operand.vmem [shape: f32[1,128], index: 2, kind: input, shape index: {}]
  %s3 = inlined_call_operand.vmem [shape: f32[2,16,128], index: 3, kind: output, shape index: {}]
  %s4 = sld [smem:[#allocation0]]
  $region30: #{conv2d_resblock.1} parent=0
    _
  %s6 = ssub.s32 1, %s4
  %s7 = scalar_select 0, %s6, %s4
  $region1: #{conv2d_resblock.1} parent=0
    #allocation2 [shape = 'u8[65536]{0}', space=vmem, size = 0x10000, scoped, tag = 'input window, operand 0, single buffered']
    #allocation3 [shape = 's32[1]{0}', space=sflag, size = 0x4, scoped, tag = 'scoped memory for conv2d_resblock.1']
    #allocation4 [shape = 'u8[49152]{0}', space=vmem, size = 0xc000, scoped, tag = 'input window, operand 1, single buffered']
    #allocation5 [shape = 's32[1]{0}', space=sflag, size = 0x4, scoped, tag = 'scoped memory for conv2d_resblock.1']
    %8 = vsyncpa [#allocation3], 0
    %9 = vsyncpa [#allocation5], 0
    // Predicated region
    $region2: #{conv2d_resblock.1} parent=1 // pred_check
      _
    $region3: #{conv2d_resblock.1} parent=1 // pred_check_branch
      %11 = sbr.rel (0) target = $region5
    $region4: #{conv2d_resblock.1} parent=1 // pred_region
      %13 = vsyncadd [#allocation3], 0
      %s14 = sshll.u32 %s0, 4
      %s15 = int_to_ptr.hbm [resolvable:$true] %s14
      %s16 = sshll.u32 [#allocation2], 4
      %s17 = int_to_ptr.vmem [resolvable:$true] %s16
      %22 = dma.hbm_to_vmem [thread:$0]  %s15, 2048, %s17, [#allocation3], 128, 128, 8
    $region5: #{conv2d_resblock.1} parent=1 // pred_fallthru
      _
    // Predicated region
    $region6: #{conv2d_resblock.1} parent=1 // pred_check
      _
    $region7: #{conv2d_resblock.1} parent=1 // pred_check_branch
      %24 = sbr.rel (0) target = $region9
    $region8: #{conv2d_resblock.1} parent=1 // pred_region
      %26 = vsyncadd [#allocation5], 0
      %s27 = sshll.u32 %s1, 4
      %s28 = int_to_ptr.hbm [resolvable:$true] %s27
      %s29 = sshll.u32 [#allocation4], 4
      %s30 = int_to_ptr.vmem [resolvable:$true] %s29
      %35 = dma.hbm_to_vmem [thread:$0]  %s28, 1536, %s30, [#allocation5], 64, 64, 4
    $region9: #{conv2d_resblock.1} parent=1 // pred_fallthru
      _
    // Predicated region
    $region10: #{conv2d_resblock.1} parent=1 // pred_check
      _
    $region11: #{conv2d_resblock.1} parent=1 // pred_check_branch
      %37 = sbr.rel (0) target = $region13
    $region12: #{conv2d_resblock.1} parent=1 // pred_region
      _
    $region13: #{conv2d_resblock.1} parent=1 // pred_fallthru
      _
    // Predicated region
    $region14: #{conv2d_resblock.1} parent=1 // pred_check
      _
    $region15: #{conv2d_resblock.1} parent=1 // pred_check_branch
      %39 = sbr.rel (0) target = $region17
    $region16: #{conv2d_resblock.1} parent=1 // pred_region
      %41 = dma.done [#allocation3], 2048
    $region17: #{conv2d_resblock.1} parent=1 // pred_fallthru
      _
    // Predicated region
    $region18: #{conv2d_resblock.1} parent=1 // pred_check
      _
    $region19: #{conv2d_resblock.1} parent=1 // pred_check_branch
      %43 = sbr.rel (0) target = $region21
    $region20: #{conv2d_resblock.1} parent=1 // pred_region
      %45 = dma.done [#allocation5], 1536
    $region21: #{conv2d_resblock.1} parent=1 // pred_fallthru
      _
    %v47 = vld [vmem:[#allocation2] sm:$0xff]
    %v48 = vld [vmem:[#allocation2 + $0x8] sm:$0xff]
    %v49 = vld [vmem:[#allocation2 + $0x10] sm:$0xff]
    %v50 = vld [vmem:[#allocation2 + $0x18] sm:$0xff]
    %v51 = vld [vmem:[#allocation2 + $0x20] sm:$0xff]
    %v52 = vld [vmem:[#allocation2 + $0x28] sm:$0xff]
    %v53 = vld [vmem:[#allocation2 + $0x30] sm:$0xff]
    %v54 = vld [vmem:[#allocation2 + $0x38] sm:$0xff]
    %v55 = vld [vmem:[#allocation2 + $0x40] sm:$0xff]
    %v56 = vld [vmem:[#allocation2 + $0x48] sm:$0xff]
    %v57 = vld [vmem:[#allocation2 + $0x50] sm:$0xff]
    %v58 = vld [vmem:[#allocation2 + $0x58] sm:$0xff]
    %v59 = vld [vmem:[#allocation2 + $0x60] sm:$0xff]
    %v60 = vld [vmem:[#allocation2 + $0x68] sm:$0xff]
    %v61 = vld [vmem:[#allocation2 + $0x70] sm:$0xff]
    %v62 = vld [vmem:[#allocation2 + $0x78] sm:$0xff]
    %vm67 = vcmask 1040384
    %v68 = vrot.slane %v47, 7
    %v69 = vrot.slane %v48, 7
    %v70 = vsel %vm67, %v68, %v69
    %v71 = vrot.slane %v55, 7
    %v72 = vrot.slane %v56, 7
    %v73 = vsel %vm67, %v71, %v72
    %v78 = vsel %vm67, 0.0, %v68
    %v79 = vsel %vm67, 0.0, %v71
    %vm80 = vcmask 1046528
    %v81 = vrot.slane %v47, 1
    %v82 = vrot.slane %v48, 1
    %v83 = vsel %vm80, %v81, %v82
    %v84 = vrot.slane %v55, 1
    %v85 = vrot.slane %v56, 1
    %v86 = vsel %vm80, %v84, %v85
    %v89 = vsel %vm80, %v82, 0.0
    %v90 = vsel %vm80, %v85, 0.0
    %v95 = vrot.slane %v49, 7
    %v96 = vrot.slane %v50, 7
    %v97 = vsel %vm67, %v95, %v96
    %v98 = vrot.slane %v57, 7
    %v99 = vrot.slane %v58, 7
    %v100 = vsel %vm67, %v98, %v99
    %v103 = vsel %vm67, 0.0, %v95
    %v104 = vsel %vm67, 0.0, %v98
    %v105 = vrot.slane %v49, 1
    %v106 = vrot.slane %v50, 1
    %v107 = vsel %vm80, %v105, %v106
    %v108 = vrot.slane %v57, 1
    %v109 = vrot.slane %v58, 1
    %v110 = vsel %vm80, %v108, %v109
    %v113 = vsel %vm80, %v106, 0.0
    %v114 = vsel %vm80, %v109, 0.0
    %v119 = vrot.slane %v51, 7
    %v120 = vrot.slane %v52, 7
    %v121 = vsel %vm67, %v119, %v120
    %v122 = vrot.slane %v59, 7
    %v123 = vrot.slane %v60, 7
    %v124 = vsel %vm67, %v122, %v123
    %v127 = vsel %vm67, 0.0, %v119
    %v128 = vsel %vm67, 0.0, %v122
    %v129 = vrot.slane %v51, 1
    %v130 = vrot.slane %v52, 1
    %v131 = vsel %vm80, %v129, %v130
    %v132 = vrot.slane %v59, 1
    %v133 = vrot.slane %v60, 1
    %v134 = vsel %vm80, %v132, %v133
    %v139 = vsel %vm80, %v130, 0.0
    %v140 = vsel %vm80, %v133, 0.0
    %v145 = vrot.slane %v53, 7
    %v146 = vrot.slane %v54, 7
    %v147 = vsel %vm67, %v145, %v146
    %v148 = vrot.slane %v61, 7
    %v149 = vrot.slane %v62, 7
    %v150 = vsel %vm67, %v148, %v149
    %v153 = vsel %vm67, 0.0, %v145
    %v154 = vsel %vm67, 0.0, %v148
    %v155 = vrot.slane %v53, 1
    %v156 = vrot.slane %v54, 1
    %v157 = vsel %vm80, %v155, %v156
    %v158 = vrot.slane %v61, 1
    %v159 = vrot.slane %v62, 1
    %v160 = vsel %vm80, %v158, %v159
    %v163 = vsel %vm80, %v156, 0.0
    %v164 = vsel %vm80, %v159, 0.0
    %165 = vrot.lane.b32.xlu0 %v47, 16
    %v166 = vpop.permute.xlu0 %165
    %167 = vrot.lane.b32.xlu0 %v48, 16
    %v168 = vpop.permute.xlu0 %167
    %169 = vrot.lane.b32.xlu0 %v55, 16
    %v170 = vpop.permute.xlu0 %169
    %171 = vrot.lane.b32.xlu0 %v56, 16
    %v172 = vpop.permute.xlu0 %171
    %179 = vrot.lane.b32.xlu0 %v83, 32
    %v180 = vpop.permute.xlu0 %179
    %181 = vrot.lane.b32.xlu0 %v89, 32
    %v182 = vpop.permute.xlu0 %181
    %183 = vrot.lane.b32.xlu0 %v86, 32
    %v184 = vpop.permute.xlu0 %183
    %185 = vrot.lane.b32.xlu0 %v90, 32
    %v186 = vpop.permute.xlu0 %185
    %193 = vrot.lane.b32.xlu0 %v103, 48
    %v194 = vpop.permute.xlu0 %193
    %195 = vrot.lane.b32.xlu0 %v97, 48
    %v196 = vpop.permute.xlu0 %195
    %197 = vrot.lane.b32.xlu0 %v104, 48
    %v198 = vpop.permute.xlu0 %197
    %199 = vrot.lane.b32.xlu0 %v100, 48
    %v200 = vpop.permute.xlu0 %199
    %205 = vrot.lane.b32.xlu0 %v49, 64
    %v206 = vpop.permute.xlu0 %205
    %207 = vrot.lane.b32.xlu0 %v50, 64
    %v208 = vpop.permute.xlu0 %207
    %209 = vrot.lane.b32.xlu0 %v57, 64
    %v210 = vpop.permute.xlu0 %209
    %211 = vrot.lane.b32.xlu0 %v58, 64
    %v212 = vpop.permute.xlu0 %211
    %219 = vrot.lane.b32.xlu0 %v107, 80
    %v220 = vpop.permute.xlu0 %219
    %221 = vrot.lane.b32.xlu0 %v113, 80
    %v222 = vpop.permute.xlu0 %221
    %223 = vrot.lane.b32.xlu0 %v110, 80
    %v224 = vpop.permute.xlu0 %223
    %225 = vrot.lane.b32.xlu0 %v114, 80
    %v226 = vpop.permute.xlu0 %225
    %233 = vrot.lane.b32.xlu0 %v127, 96
    %v234 = vpop.permute.xlu0 %233
    %235 = vrot.lane.b32.xlu0 %v121, 96
    %v236 = vpop.permute.xlu0 %235
    %237 = vrot.lane.b32.xlu0 %v128, 96
    %v238 = vpop.permute.xlu0 %237
    %239 = vrot.lane.b32.xlu0 %v124, 96
    %v240 = vpop.permute.xlu0 %239
    %245 = vrot.lane.b32.xlu0 %v51, 112
    %v246 = vpop.permute.xlu0 %245
    %247 = vrot.lane.b32.xlu0 %v52, 112
    %v248 = vpop.permute.xlu0 %247
    %249 = vrot.lane.b32.xlu0 %v59, 112
    %v250 = vpop.permute.xlu0 %249
    %251 = vrot.lane.b32.xlu0 %v60, 112
    %v252 = vpop.permute.xlu0 %251
    %259 = vrot.lane.b32.xlu0 %v153, 16
    %v260 = vpop.permute.xlu0 %259
    %261 = vrot.lane.b32.xlu0 %v147, 16
    %v262 = vpop.permute.xlu0 %261
    %263 = vrot.lane.b32.xlu0 %v154, 16
    %v264 = vpop.permute.xlu0 %263
    %265 = vrot.lane.b32.xlu0 %v150, 16
    %v266 = vpop.permute.xlu0 %265
    %271 = vrot.lane.b32.xlu0 %v53, 32
    %v272 = vpop.permute.xlu0 %271
    %273 = vrot.lane.b32.xlu0 %v54, 32
    %v274 = vpop.permute.xlu0 %273
    %275 = vrot.lane.b32.xlu0 %v61, 32
    %v276 = vpop.permute.xlu0 %275
    %277 = vrot.lane.b32.xlu0 %v62, 32
    %v278 = vpop.permute.xlu0 %277
    %285 = vrot.lane.b32.xlu0 %v157, 48
    %v286 = vpop.permute.xlu0 %285
    %287 = vrot.lane.b32.xlu0 %v163, 48
    %v288 = vpop.permute.xlu0 %287
    %289 = vrot.lane.b32.xlu0 %v160, 48
    %v290 = vpop.permute.xlu0 %289
    %291 = vrot.lane.b32.xlu0 %v164, 48
    %v292 = vpop.permute.xlu0 %291
    %vm297 = vcmask 130048
    %v298 = vsel %vm297, %v78, %v166
    %v299 = vsel %vm297, %v70, %v168
    %v300 = vsel %vm297, %v79, %v170
    %v301 = vsel %vm297, %v73, %v172
    %vm302 = vcmask 261120
    %v303 = vsel %vm302, %v298, %v180
    %v304 = vsel %vm302, %v299, %v182
    %v305 = vsel %vm302, %v300, %v184
    %v306 = vsel %vm302, %v301, %v186
    %vm307 = vcmask 392192
    %v308 = vsel %vm307, %v303, %v194
    %v309 = vsel %vm307, %v304, %v196
    %v310 = vsel %vm307, %v305, %v198
    %v311 = vsel %vm307, %v306, %v200
    %vm312 = vcmask 523264
    %v313 = vsel %vm312, %v308, %v206
    %v314 = vsel %vm312, %v309, %v208
    %v315 = vsel %vm312, %v310, %v210
    %v316 = vsel %vm312, %v311, %v212
    %vm317 = vcmask 654336
    %v318 = vsel %vm317, %v313, %v220
    %v319 = vsel %vm317, %v314, %v222
    %v320 = vsel %vm317, %v315, %v224
    %v321 = vsel %vm317, %v316, %v226
    %vm322 = vcmask 785408
    %v323 = vsel %vm322, %v318, %v234
    %v324 = vsel %vm322, %v319, %v236
    %v325 = vsel %vm322, %v320, %v238
    %v326 = vsel %vm322, %v321, %v240
    %vm327 = vcmask 916480
    %v328 = vsel %vm327, %v323, %v246
    %v329 = vsel %vm327, %v324, %v248
    %v330 = vsel %vm327, %v325, %v250
    %v331 = vsel %vm327, %v326, %v252
    %v332 = vsel %vm297, %v131, %v260
    %v333 = vsel %vm297, %v139, %v262
    %v334 = vsel %vm297, %v134, %v264
    %v335 = vsel %vm297, %v140, %v266
    %v336 = vsel %vm302, %v332, %v272
    %v337 = vsel %vm302, %v333, %v274
    %v338 = vsel %vm302, %v334, %v276
    %v339 = vsel %vm302, %v335, %v278
    %v340 = vsel %vm307, %v336, %v286
    %v341 = vsel %vm307, %v337, %v288
    %v342 = vsel %vm307, %v338, %v290
    %v343 = vsel %vm307, %v339, %v292
    %v344 = vpack.c.bf16 %v329, %v328
    %v345 = vpack.c.bf16 %v341, %v340
    %v346 = vpack.c.bf16 %v331, %v330
    %v347 = vpack.c.bf16 %v343, %v342
    %v348 = vld [vmem:[#allocation4] sm:$0xf]
    %v349 = vld [vmem:[#allocation4 + $0x4] sm:$0xf]
    %v350 = vld [vmem:[#allocation4 + $0x8] sm:$0xf]
    %v351 = vld [vmem:[#allocation4 + $0xc] sm:$0xf]
    %v352 = vld [vmem:[#allocation4 + $0x10] sm:$0xf]
    %v353 = vld [vmem:[#allocation4 + $0x14] sm:$0xf]
    %v354 = vld [vmem:[#allocation4 + $0x18] sm:$0xf]
    %v355 = vld [vmem:[#allocation4 + $0x1c] sm:$0xf]
    %v356 = vld [vmem:[#allocation4 + $0x20] sm:$0xf]
    %v357 = vld [vmem:[#allocation4 + $0x24] sm:$0xf]
    %v358 = vld [vmem:[#allocation4 + $0x28] sm:$0xf]
    %v359 = vld [vmem:[#allocation4 + $0x2c] sm:$0xf]
    %v360 = vld [vmem:[#allocation4 + $0x30] sm:$0xf]
    %v361 = vld [vmem:[#allocation4 + $0x34] sm:$0xf]
    %v362 = vld [vmem:[#allocation4 + $0x38] sm:$0xf]
    %v363 = vld [vmem:[#allocation4 + $0x3c] sm:$0xf]
    %v364 = vld [vmem:[#allocation4 + $0x40] sm:$0xf]
    %v365 = vld [vmem:[#allocation4 + $0x44] sm:$0xf]
    %v366 = vld [vmem:[#allocation4 + $0x48] sm:$0xf]
    %v367 = vld [vmem:[#allocation4 + $0x4c] sm:$0xf]
    %v368 = vld [vmem:[#allocation4 + $0x50] sm:$0xf]
    %v369 = vld [vmem:[#allocation4 + $0x54] sm:$0xf]
    %v370 = vld [vmem:[#allocation4 + $0x58] sm:$0xf]
    %v371 = vld [vmem:[#allocation4 + $0x5c] sm:$0xf]
    %v372 = vld [vmem:[%s2] sm:$0x1]
    %v374 = vperm.slane %v372, 0
    %v400 = vunpack.c.l.b16 %v348
    %v401 = vunpack.c.l.b16 %v349
    %v402 = vunpack.c.l.b16 %v350
    %v403 = vunpack.c.l.b16 %v351
    %v404 = vunpack.c.l.b16 %v352
    %v405 = vunpack.c.l.b16 %v353
    %v406 = vunpack.c.l.b16 %v354
    %v407 = vunpack.c.l.b16 %v355
    %v408 = vunpack.c.l.b16 %v356
    %v409 = vunpack.c.l.b16 %v357
    %v410 = vunpack.c.l.b16 %v358
    %v411 = vunpack.c.l.b16 %v359
    %v412 = vunpack.c.l.b16 %v360
    %v413 = vunpack.c.l.b16 %v361
    %v414 = vunpack.c.l.b16 %v362
    %v415 = vunpack.c.l.b16 %v363
    %v416 = vunpack.c.l.b16 %v364
    %v417 = vunpack.c.l.b16 %v365
    %v418 = vunpack.c.l.b16 %v366
    %v419 = vunpack.c.l.b16 %v367
    %v420 = vunpack.c.l.b16 %v368
    %v421 = vunpack.c.l.b16 %v369
    %v422 = vunpack.c.l.b16 %v370
    %v423 = vunpack.c.l.b16 %v371
    %v424 = vpack.c.b16 %v401, %v400
    %v425 = vpack.c.b16 %v403, %v402
    %v426 = vpack.c.b16 %v405, %v404
    %v427 = vpack.c.b16 %v407, %v406
    %v428 = vpack.c.b16 %v409, %v408
    %v429 = vpack.c.b16 %v411, %v410
    %v430 = vpack.c.b16 %v413, %v412
    %v431 = vpack.c.b16 %v415, %v414
    %v432 = vpack.c.b16 %v417, %v416
    %v433 = vpack.c.b16 %v419, %v418
    %v434 = vpack.c.b16 %v421, %v420
    %v435 = vpack.c.b16 %v423, %v422
    %v449 = vsel %vm312, %v345, 0
    %v452 = vsel %vm312, %v347, 0
    %454 = vmatpush.bf16.msra.mxu0 %v431
    %455 = vmatpush.bf16.msra.mxu0 %v430
    %456 = vmatpush.bf16.msra.mxu0 %v429
    %457 = vmatpush.bf16.msra.mxu0 %v428
    %458 = vmatpush.bf16.msra.mxu0 %v427
    %459 = vmatpush.bf16.msra.mxu0 %v426
    %460 = vmatpush.bf16.msra.mxu0 %v425
    %461 = vmatpush.bf16.msra.mxu0 %v424
    %462 = vmatmul.bf16.gmra.mxu0 %v344
    %v463 = vpop.f32.mrf.mxu0
    %v464 = vadd.f32 %v374, %v463
    %v465 = vpop.f32.mrf.mxu0
    %v466 = vadd.f32 %v374, %v465
    %467 = vmatmul.bf16.gmra.mxu0 %v346
    %v468 = vpop.f32.mrf.mxu0
    %v469 = vadd.f32 %v374, %v468
    %v470 = vpop.f32.mrf.mxu0
    %v471 = vadd.f32 %v374, %v470
    %472 = vdwg.mxu0
    %473 = vmatpush.bf16.msra.mxu0 0
    %474 = vmatpush.bf16.msra.mxu0 0
    %475 = vmatpush.bf16.msra.mxu0 0
    %476 = vmatpush.bf16.msra.mxu0 0
    %477 = vmatpush.bf16.msra.mxu0 %v435
    %478 = vmatpush.bf16.msra.mxu0 %v434
    %479 = vmatpush.bf16.msra.mxu0 %v433
    %480 = vmatpush.bf16.msra.mxu0 %v432
    %481 = vmatmul.bf16.gmra.mxu0 %v449
    %v482 = vpop.f32.mrf.mxu0
    %v483 = vadd.f32 %v464, %v482
    %v484 = vpop.f32.mrf.mxu0
    %v485 = vadd.f32 %v466, %v484
    %486 = vmatmul.bf16.gmra.mxu0 %v452
    %v487 = vpop.f32.mrf.mxu0
    %v488 = vadd.f32 %v469, %v487
    %v489 = vpop.f32.mrf.mxu0
    %v490 = vadd.f32 %v471, %v489
    %491 = vdwg.mxu0
    %v492 = vxor.u32 %v483, 2147483648
    %v493 = vxor.u32 %v485, 2147483648
    %v494 = vxor.u32 %v488, 2147483648
    %v495 = vxor.u32 %v490, 2147483648
    %v496 = vmul.f32 %v492, 1.442695
    %v497 = vpow.pop %v496
    %v498 = vmul.f32 %v493, 1.442695
    %v499 = vpow.pop %v498
    %v500 = vmul.f32 %v494, 1.442695
    %v501 = vpow.pop %v500
    %v502 = vmul.f32 %v495, 1.442695
    %v503 = vpow.pop %v502
    %v504 = vadd.f32 %v497, 1.0
    %v505 = vadd.f32 %v499, 1.0
    %v506 = vadd.f32 %v501, 1.0
    %v507 = vadd.f32 %v503, 1.0
    %v508 = vrcp.pop %v504
    %v509 = vmul.f32 %v504, %v508
    %v510 = vsub.f32 1.0, %v509
    %v511 = vmul.f32 %v508, %v510
    %v512 = vadd.f32 %v508, %v511
    %vm513 = vweird.f32 %v504
    %vm514 = vweird.f32 %v508
    %vm515 = vmor %vm513, %vm514
    %v516 = vsel %vm515, %v508, %v512
    %v517 = vand.u32 2147483647, %v504
    %vm518 = vcmp.eq.f32.partialorder %v517, 8.507059e+37
    %v519 = vand.u32 %v504, 2147483648
    %v520 = vor.u32 1.1754944e-38, %v519
    %v521 = vsel %vm518, %v520, %v516
    %v522 = vmul.f32 1.0, %v521
    %v523 = vrcp.pop %v505
    %v524 = vmul.f32 %v505, %v523
    %v525 = vsub.f32 1.0, %v524
    %v526 = vmul.f32 %v523, %v525
    %v527 = vadd.f32 %v523, %v526
    %vm528 = vweird.f32 %v505
    %vm529 = vweird.f32 %v523
    %vm530 = vmor %vm528, %vm529
    %v531 = vsel %vm530, %v523, %v527
    %v532 = vand.u32 2147483647, %v505
    %vm533 = vcmp.eq.f32.partialorder %v532, 8.507059e+37
    %v534 = vand.u32 %v505, 2147483648
    %v535 = vor.u32 1.1754944e-38, %v534
    %v536 = vsel %vm533, %v535, %v531
    %v537 = vmul.f32 1.0, %v536
    %v538 = vrcp.pop %v506
    %v539 = vmul.f32 %v506, %v538
    %v540 = vsub.f32 1.0, %v539
    %v541 = vmul.f32 %v538, %v540
    %v542 = vadd.f32 %v538, %v541
    %vm543 = vweird.f32 %v506
    %vm544 = vweird.f32 %v538
    %vm545 = vmor %vm543, %vm544
    %v546 = vsel %vm545, %v538, %v542
    %v547 = vand.u32 2147483647, %v506
    %vm548 = vcmp.eq.f32.partialorder %v547, 8.507059e+37
    %v549 = vand.u32 %v506, 2147483648
    %v550 = vor.u32 1.1754944e-38, %v549
    %v551 = vsel %vm548, %v550, %v546
    %v552 = vmul.f32 1.0, %v551
    %v553 = vrcp.pop %v507
    %v554 = vmul.f32 %v507, %v553
    %v555 = vsub.f32 1.0, %v554
    %v556 = vmul.f32 %v553, %v555
    %v557 = vadd.f32 %v553, %v556
    %vm558 = vweird.f32 %v507
    %vm559 = vweird.f32 %v553
    %vm560 = vmor %vm558, %vm559
    %v561 = vsel %vm560, %v553, %v557
    %v562 = vand.u32 2147483647, %v507
    %vm563 = vcmp.eq.f32.partialorder %v562, 8.507059e+37
    %v564 = vand.u32 %v507, 2147483648
    %v565 = vor.u32 1.1754944e-38, %v564
    %v566 = vsel %vm563, %v565, %v561
    %v567 = vmul.f32 1.0, %v566
    %v568 = vmul.f32 %v483, %v522
    %v569 = vmul.f32 %v485, %v537
    %v570 = vmul.f32 %v488, %v552
    %v571 = vmul.f32 %v490, %v567
    %572 = vst [vmem:[%s3] sm:$0xff] %v568
    %573 = vst [vmem:[%s3 + $0x8] sm:$0xff] %v569
    %574 = vst [vmem:[%s3 + $0x10] sm:$0xff] %v570
    %575 = vst [vmem:[%s3 + $0x18] sm:$0xff] %v571
    // Predicated region
    $region22: #{conv2d_resblock.1} parent=1 // pred_check
      _
    $region23: #{conv2d_resblock.1} parent=1 // pred_check_branch
      %577 = sbr.rel (0) target = $region25
    $region24: #{conv2d_resblock.1} parent=1 // pred_region
      _
    $region25: #{conv2d_resblock.1} parent=1 // pred_fallthru
      _
    // Predicated region
    $region26: #{conv2d_resblock.1} parent=1 // pred_check
      _
    $region27: #{conv2d_resblock.1} parent=1 // pred_check_branch
      %579 = sbr.rel (0) target = $region29
    $region28: #{conv2d_resblock.1} parent=1 // pred_region
      _
    $region29: #{conv2d_resblock.1} parent=1 // pred_fallthru
      _
    %580 = vsyncpa [#allocation3], 1
    %581 = vsyncpa [#allocation5], 1

</llo_original>
